<compile_context>
chip_gen: v7x
topology: tpu7x:2x2x1
jax: 0.10.0
libtpu: 0.0.40
codegen_flags: <defaults>
</compile_context>

<pallas_src>
import functools

import jax
import jax.numpy as jnp
import numpy as np
from jax.experimental import pallas as pl
from jax.experimental.pallas import tpu as pltpu


def _fuse_1x1_kernel(ef_ref, sf_ref, wef_ref, wsf_ref, b_ref, gamma_ref, o_ref):
    """One (batch, spatial-tile) block per grid step.

    ef_ref   : (C_ef, T)   ef slab, channels on sublanes / spatial on lanes
    sf_ref   : (C_sf, T)   sf slab
    wef_ref  : (C_out, C_ef)   1x1-conv weight slice that multiplies ef
    wsf_ref  : (C_out, C_sf)   1x1-conv weight slice that multiplies sf
    b_ref    : (C_out, 1)      conv bias (broadcast over lanes)
    gamma_ref: (1, 1) in SMEM  scalar gamma
    o_ref    : (C_out, T)
    """
    ef = ef_ref[...]
    sf = sf_ref[...]
    gamma = gamma_ref[0, 0]

    # 1x1 conv over cat(ef, sf) == W_ef @ ef + W_sf @ sf  (f32 accumulation).
    conv = jnp.dot(wef_ref[...], ef, preferred_element_type=jnp.float32)
    conv = conv + jnp.dot(wsf_ref[...], sf, preferred_element_type=jnp.float32)
    conv = conv + b_ref[...]                      # (C_out, 1) -> lane broadcast

    # gamma * conv + ef   (residual requires C_out == C_ef, as in PyTorch).
    out = gamma * conv + ef.astype(jnp.float32)
    o_ref[...] = out.astype(o_ref.dtype)


def _pick_lane_tile(hw, target):
    """Largest multiple of 128 that divides hw and is <= target (else full hw)."""
    if hw % 128 != 0:
        return hw                      # full extent is always a legal block
    t = max(128, (min(target, hw) // 128) * 128)
    while hw % t != 0:
        t -= 128
    return t


def fuse_1x1_pallas(ef, sf, attn, w, b, gamma, *, lane_tile=1024):
    """Forward of Fuse_1x1.

    ef   : (N, C_ef, H, W)
    sf   : (N, C_sf, H, W)
    attn : unused (the PyTorch forward ignores it)
    w    : (C_out, C_ef + C_sf, 1, 1)   torch Conv2d weight
    b    : (C_out,)                      torch Conv2d bias
    gamma: scalar parameter
    Returns (N, C_out, H, W).
    """
    del attn                                       # unused, as in the module
    N, C_ef, H, W = ef.shape
    _, C_sf, _, _ = sf.shape
    C_out = w.shape[0]
    HW = H * W

    # Free reshapes: put spatial on the minor (lane) axis.
    ef2 = ef.reshape(N, C_ef, HW)
    sf2 = sf.reshape(N, C_sf, HW)

    # Split the 1x1 conv weight along the input-channel (concat) axis.
    w2 = w[:, :, 0, 0]                             # (C_out, C_ef + C_sf)
    w_ef = w2[:, :C_ef]
    w_sf = w2[:, C_ef:]
    b2 = b.reshape(C_out, 1).astype(jnp.float32)
    gamma2 = jnp.asarray(gamma, jnp.float32).reshape(1, 1)

    T = _pick_lane_tile(HW, lane_tile)
    grid = (N, HW // T)

    out = pl.pallas_call(
        _fuse_1x1_kernel,
        out_shape=jax.ShapeDtypeStruct((N, C_out, HW), ef.dtype),
        grid_spec=pltpu.PrefetchScalarGridSpec(
            num_scalar_prefetch=0,
            grid=grid,
            in_specs=[
                pl.BlockSpec((None, C_ef, T), lambda n, t: (n, 0, t)),
                pl.BlockSpec((None, C_sf, T), lambda n, t: (n, 0, t)),
                pl.BlockSpec((C_out, C_ef), lambda n, t: (0, 0)),
                pl.BlockSpec((C_out, C_sf), lambda n, t: (0, 0)),
                pl.BlockSpec((C_out, 1), lambda n, t: (0, 0)),
                pl.BlockSpec(memory_space=pltpu.MemorySpace.SMEM),
            ],
            out_specs=pl.BlockSpec((None, C_out, T), lambda n, t: (n, 0, t)),
        ),
        compiler_params=pltpu.CompilerParams(
            dimension_semantics=("parallel", "parallel")),
    )(ef2, sf2, w_ef, w_sf, b2, gamma2)

    return out.reshape(N, C_out, H, W)


def fuse_1x1_reference(ef, sf, attn, w, b, gamma):
    """Pure-JAX reference matching the PyTorch forward."""
    del attn
    x = jnp.concatenate([ef, sf], axis=1)
    conv = jnp.einsum('oi,nihw->nohw', w[:, :, 0, 0], x)
    conv = conv + b[None, :, None, None]
    return gamma * conv + ef


if __name__ == "__main__":
    # Shapes implied by the module: out_channels == ef channels (residual add),
    # in_channels == ef channels + sf channels.  Attn is accepted but unused.
    N, C_ef, C_sf, H, W = 2, 4, 4, 16, 16
    C_out = C_ef
    attn_channels = 4

    key = jax.random.PRNGKey(0)
    k1, k2, k3, k4, k5 = jax.random.split(key, 5)
    ef = jax.random.normal(k1, (N, C_ef, H, W), dtype=jnp.float32)
    sf = jax.random.normal(k2, (N, C_sf, H, W), dtype=jnp.float32)
    attn = jax.random.normal(k3, (N, attn_channels, H, W), dtype=jnp.float32)
    w = 0.1 * jax.random.normal(k4, (C_out, C_ef + C_sf, 1, 1), dtype=jnp.float32)
    b = 0.1 * jax.random.normal(k5, (C_out,), dtype=jnp.float32)
    gamma = jnp.float32(0.25)          # module init: torch.ones(1) * 0.25

    # lane_tile=128 exercises the spatial grid axis (grid = (2, 2)) at toy size.
    out = fuse_1x1_pallas(ef, sf, attn, w, b, gamma, lane_tile=128)
    out = jax.block_until_ready(out)

    ref = fuse_1x1_reference(ef, sf, attn, w, b, gamma)
    np.testing.assert_allclose(np.asarray(out), np.asarray(ref),
                               rtol=1e-4, atol=1e-4)
    print("KERNEL_OK")
</pallas_src>

<mosaic_0001>
module attributes {stable_mosaic.version = 11 : i64} {
  func.func @_fuse_1x1_kernel(%arg0: i32, %arg1: i32, %arg2: memref<1x4x128xf32, #tpu.memory_space<vmem>>, %arg3: memref<1x4x128xf32, #tpu.memory_space<vmem>>, %arg4: memref<4x4xf32, #tpu.memory_space<vmem>>, %arg5: memref<4x4xf32, #tpu.memory_space<vmem>>, %arg6: memref<4x1xf32, #tpu.memory_space<vmem>>, %arg7: memref<1x1xf32, #tpu.memory_space<smem>>, %arg8: memref<1x4x128xf32, #tpu.memory_space<vmem>>) attributes {dimension_semantics = [#tpu.dimension_semantics<parallel>, #tpu.dimension_semantics<parallel>], iteration_bounds = array<i64: 2, 2>, scalar_prefetch = 0 : i64, scratch_operands = 0 : i64, tpu.core_type = #tpu.core_type<tc>, window_params = [{transform_indices = @transform_0, window_bounds = array<i64: 1, 4, 128>}, {transform_indices = @transform_1, window_bounds = array<i64: 1, 4, 128>}, {pipeline_mode = #tpu.pipeline_mode<synchronous>, transform_indices = @transform_2, window_bounds = array<i64: 4, 4>}, {pipeline_mode = #tpu.pipeline_mode<synchronous>, transform_indices = @transform_3, window_bounds = array<i64: 4, 4>}, {pipeline_mode = #tpu.pipeline_mode<synchronous>, transform_indices = @transform_4, window_bounds = array<i64: 4, 1>}, {transform_indices = @transform_5, window_bounds = array<i64: 1, 1>}, {transform_indices = @transform_6, window_bounds = array<i64: 1, 4, 128>}]} {
    %c0 = arith.constant 0 : index
    %c0_0 = arith.constant 0 : index
    %c0_1 = arith.constant 0 : index
    %0 = vector.load %arg2[%c0, %c0_0, %c0_1] : memref<1x4x128xf32, #tpu.memory_space<vmem>>, vector<1x4x128xf32>
    %1 = vector.shape_cast %0 : vector<1x4x128xf32> to vector<4x128xf32>
    %c0_2 = arith.constant 0 : index
    %c0_3 = arith.constant 0 : index
    %c0_4 = arith.constant 0 : index
    %2 = vector.load %arg3[%c0_2, %c0_3, %c0_4] : memref<1x4x128xf32, #tpu.memory_space<vmem>>, vector<1x4x128xf32>
    %3 = vector.shape_cast %2 : vector<1x4x128xf32> to vector<4x128xf32>
    %c0_5 = arith.constant 0 : index
    %c0_6 = arith.constant 0 : index
    %4 = memref.load %arg7[%c0_5, %c0_6] : memref<1x1xf32, #tpu.memory_space<smem>>
    %c0_7 = arith.constant 0 : index
    %c0_8 = arith.constant 0 : index
    %5 = vector.load %arg4[%c0_7, %c0_8] : memref<4x4xf32, #tpu.memory_space<vmem>>, vector<4x4xf32>
    %cst = arith.constant dense<0.000000e+00> : vector<4x128xf32>
    %6 = tpu.matmul %5, %1, %cst {dimension_numbers = #tpu.dot_dimension_numbers<[1], [0], [0], [1], [0, 0, 1, 1], [], []>} : vector<4x4xf32>, vector<4x128xf32>, vector<4x128xf32> -> vector<4x128xf32>
    %c0_9 = arith.constant 0 : index
    %c0_10 = arith.constant 0 : index
    %7 = vector.load %arg5[%c0_9, %c0_10] : memref<4x4xf32, #tpu.memory_space<vmem>>, vector<4x4xf32>
    %cst_11 = arith.constant dense<0.000000e+00> : vector<4x128xf32>
    %8 = tpu.matmul %7, %3, %cst_11 {dimension_numbers = #tpu.dot_dimension_numbers<[1], [0], [0], [1], [0, 0, 1, 1], [], []>} : vector<4x4xf32>, vector<4x128xf32>, vector<4x128xf32> -> vector<4x128xf32>
    %9 = arith.addf %6, %8 : vector<4x128xf32>
    %c0_12 = arith.constant 0 : index
    %c0_13 = arith.constant 0 : index
    %10 = vector.load %arg6[%c0_12, %c0_13] : memref<4x1xf32, #tpu.memory_space<vmem>>, vector<4x1xf32>
    %11 = vector.broadcast %10 : vector<4x1xf32> to vector<4x128xf32>
    %12 = arith.addf %9, %11 : vector<4x128xf32>
    %13 = vector.broadcast %4 : f32 to vector<4x128xf32>
    %14 = arith.mulf %13, %12 : vector<4x128xf32>
    %15 = arith.addf %14, %1 : vector<4x128xf32>
    %c0_14 = arith.constant 0 : index
    %c0_15 = arith.constant 0 : index
    %c0_16 = arith.constant 0 : index
    %16 = vector.load %arg8[%c0_14, %c0_15, %c0_16] : memref<1x4x128xf32, #tpu.memory_space<vmem>>, vector<1x4x128xf32>
    %17 = vector.shape_cast %16 : vector<1x4x128xf32> to vector<4x128xf32>
    %18 = vector.shape_cast %15 : vector<4x128xf32> to vector<1x4x128xf32>
    tpu.vector_store %arg8[%c0_14, %c0_15, %c0_16], %18 {strides = array<i32>} : memref<1x4x128xf32, #tpu.memory_space<vmem>>, vector<1x4x128xf32>,
    return
  }
  func.func @transform_0(%arg0: i32, %arg1: i32) -> (i32, i32, i32) {
    %c0_i32 = arith.constant 0 : i32
    %c0_i32_0 = arith.constant 0 : i32
    return %arg0, %c0_i32, %arg1 : i32, i32, i32
  }
  func.func @transform_1(%arg0: i32, %arg1: i32) -> (i32, i32, i32) {
    %c0_i32 = arith.constant 0 : i32
    %c0_i32_0 = arith.constant 0 : i32
    return %arg0, %c0_i32, %arg1 : i32, i32, i32
  }
  func.func @transform_2(%arg0: i32, %arg1: i32) -> (i32, i32) {
    %c0_i32 = arith.constant 0 : i32
    %c0_i32_0 = arith.constant 0 : i32
    %c0_i32_1 = arith.constant 0 : i32
    return %c0_i32, %c0_i32_0 : i32, i32
  }
  func.func @transform_3(%arg0: i32, %arg1: i32) -> (i32, i32) {
    %c0_i32 = arith.constant 0 : i32
    %c0_i32_0 = arith.constant 0 : i32
    %c0_i32_1 = arith.constant 0 : i32
    return %c0_i32, %c0_i32_0 : i32, i32
  }
  func.func @transform_4(%arg0: i32, %arg1: i32) -> (i32, i32) {
    %c0_i32 = arith.constant 0 : i32
    %c0_i32_0 = arith.constant 0 : i32
    %c0_i32_1 = arith.constant 0 : i32
    return %c0_i32, %c0_i32_0 : i32, i32
  }
  func.func @transform_5(%arg0: i32, %arg1: i32) -> (i32, i32) {
    %c0_i32 = arith.constant 0 : i32
    %c0_i32_0 = arith.constant 0 : i32
    %c0_i32_1 = arith.constant 0 : i32
    return %c0_i32, %c0_i32_0 : i32, i32
  }
  func.func @transform_6(%arg0: i32, %arg1: i32) -> (i32, i32, i32) {
    %c0_i32 = arith.constant 0 : i32
    %c0_i32_0 = arith.constant 0 : i32
    return %arg0, %c0_i32, %arg1 : i32, i32, i32
  }
}

</mosaic_0001>

<llo_original>
// kernel: tpu_custom_call.1
$region0: #{tpu_custom_call.1}
  #allocation0 [shape = 'u32[]', space=smem, size = 0x4, offset = 0x4, fixed_abs, tag = 'smem constant byte address 0x4 - core index']
  #allocation1 [shape = 'u32[144,128]{1,0:T(1,128)}', space=vmem, size = 0x12000, scoped, tag = 'internal scratch']
  #allocation2 [shape = 'f32[1,1]{1,0:T(1,128)S(6)}', space=smem, size = 0x200, scoped, tag = 'scoped memory for tpu_custom_call.1']
  %s0 = inlined_call_operand.hbm [shape: f32[2,4,256], index: 0, kind: input, shape index: {}]
  %s1 = inlined_call_operand.hbm [shape: f32[2,4,256], index: 1, kind: input, shape index: {}]
  %s2 = inlined_call_operand.vmem [shape: f32[4,4], index: 2, kind: input, shape index: {}]
  %s3 = inlined_call_operand.vmem [shape: f32[4,4], index: 3, kind: input, shape index: {}]
  %s4 = inlined_call_operand.vmem [shape: f32[4,1], index: 4, kind: input, shape index: {}]
  %s5 = inlined_call_operand.<no memory space> [shape: f32[1,1], index: 5, kind: input, shape index: {}]
  %s6 = inlined_call_operand.hbm [shape: f32[2,4,256], index: 6, kind: output, shape index: {}]
  %s7 = sld [smem:[#allocation0]]
  $region65: #{tpu_custom_call.1} parent=0
    _
  %s9 = ssub.s32 1, %s7
  %s10 = scalar_select 0, %s9, %s7
  %11 = sst [smem:[#allocation2]] %s5
  $region1: #{tpu_custom_call.1} parent=0
    #allocation3 [shape = 'u8[4096]{0}', space=vmem, size = 0x1000, scoped, tag = 'input window, operand 0']
    #allocation4 [shape = 's32[2]{0}', space=sflag, size = 0x8, scoped, tag = 'scoped memory for tpu_custom_call.1']
    #allocation5 [shape = 's32[2]{0}', space=sflag, size = 0x8, scoped, tag = 'scoped memory for tpu_custom_call.1']
    #allocation6 [shape = 'u8[4096]{0}', space=vmem, size = 0x1000, scoped, tag = 'input window, operand 1']
    #allocation7 [shape = 's32[2]{0}', space=sflag, size = 0x8, scoped, tag = 'scoped memory for tpu_custom_call.1']
    #allocation8 [shape = 'u8[4096]{0}', space=vmem, size = 0x1000, scoped, tag = 'output window, operand 0']
    %12 = vsyncpa [#allocation4], 0
    %s13 = scalar_lea.sflag [#allocation4], 1
    %14 = vsyncpa %s13, 0
    %15 = vsyncpa [#allocation7], 0
    %s16 = scalar_lea.sflag [#allocation7], 1
    %17 = vsyncpa %s16, 0
    %18 = vsyncpa [#allocation5], 0
    %s19 = scalar_lea.sflag [#allocation5], 1
    %20 = vsyncpa %s19, 0
    loop: start=0, step=1, limit=6
    $region2: #{tpu_custom_call.1} parent=1 // loop_pre_header
      _
    $region3: #{tpu_custom_call.1} parent=1 // loop_header
      %s22 = sphi 0, %s26
      %p23 = scmp.ge.s32.totalorder %s22, 6
      %s29 = sphi 0, %s41
      %s30 = sphi 0, %s37
      %s31 = sphi 0, %s29
      %s32 = sphi 0, %s30
      %s33 = sphi 0, %s31
      %s34 = sphi 0, %s32
      %s46 = sphi 0, %s48
      %s49 = sphi 0, %s46
      %s50 = sphi 0, %s49
      %s66 = sphi 0, %s50
      %s74 = sphi 0, %s76
      %s77 = sphi 0, %s74
      %s78 = sphi 0, %s77
      %s94 = sphi 0, %s78
      %s98 = sphi 0, %s98
      %s100 = sphi 0, %s98
      %s101 = sphi 0, %s100
      %s115 = sphi 0, %s101
      %s119 = sphi 0, %s119
      %s121 = sphi 0, %s119
      %s122 = sphi 0, %s121
      %s136 = sphi 0, %s122
      %s140 = sphi 0, %s140
      %s142 = sphi 0, %s140
      %s143 = sphi 0, %s142
      %s157 = sphi 0, %s143
      %s161 = sphi 0, %s161
      %s163 = sphi 0, %s161
      %s164 = sphi 0, %s163
      %s178 = sphi 0, %s164
      %s186 = sphi 0, %s188
      %s189 = sphi 0, %s186
      %s190 = sphi 0, %s189
      %s206 = sphi 0, %s190
    $region4: #{tpu_custom_call.1} parent=1 // loop_header_branch
      %25 = sbr.rel (%p23) target = $region8
    $region5: #{tpu_custom_call.1} parent=1 // loop_body
      %s27 = ssub.s32 %s22, 1
      %s28 = ssub.s32 %s22, 2
      %s35 = sadd.s32 1, %s30
      %p36 = scmp.ge.s32.totalorder %s35, 2
      %s37 = scalar_select %p36, 0, %s35
      %s38 = sadd.s32 1, %s29
      %s39 = scalar_select %p36, %s38, %s29
      %p40 = scmp.ge.s32.totalorder %s39, 2
      %s41 = scalar_select %p40, 0, %s39
      %s42 = ssub.s32 %s29, %s41
      %s43 = ssub.s32 %s30, %s37
      %s44 = sor.u32 %s42, %s43
      %p45 = scmp.eq.s32.totalorder %s44, 0
      %s47 = sadd.s32 %s46, 1
      %s48 = scalar_select %p45, %s46, %s47
      %p51 = pneg %p45
      %p52 = scmp.eq.s32.totalorder %s22, 3
      %p53 = por %p51, %p52
      %p54 = scmp.ne.s32.totalorder %s46, %s49
      %p55 = scmp.eq.s32.totalorder %s22, 0
      %p56 = por %p54, %p55
      %p57 = scmp.ne.s32.totalorder %s46, %s49
      %p58 = scmp.eq.s32.totalorder %s27, 3
      %p59 = por %p57, %p58
      %p60 = scmp.ne.s32.totalorder %s49, %s50
      %p61 = scmp.eq.s32.totalorder %s27, 0
      %p62 = por %p60, %p61
      %p63 = scmp.ne.s32.totalorder %s49, %s50
      %p64 = scmp.eq.s32.totalorder %s28, 3
      %p65 = por %p63, %p64
      %p67 = scmp.ne.s32.totalorder %s50, %s66
      %p68 = scmp.eq.s32.totalorder %s28, 0
      %p69 = por %p67, %p68
      %s70 = ssub.s32 %s29, %s41
      %s71 = ssub.s32 %s30, %s37
      %s72 = sor.u32 %s70, %s71
      %p73 = scmp.eq.s32.totalorder %s72, 0
      %s75 = sadd.s32 %s74, 1
      %s76 = scalar_select %p73, %s74, %s75
      %p79 = pneg %p73
      %p80 = scmp.eq.s32.totalorder %s22, 3
      %p81 = por %p79, %p80
      %p82 = scmp.ne.s32.totalorder %s74, %s77
      %p83 = scmp.eq.s32.totalorder %s22, 0
      %p84 = por %p82, %p83
      %p85 = scmp.ne.s32.totalorder %s74, %s77
      %p86 = scmp.eq.s32.totalorder %s27, 3
      %p87 = por %p85, %p86
      %p88 = scmp.ne.s32.totalorder %s77, %s78
      %p89 = scmp.eq.s32.totalorder %s27, 0
      %p90 = por %p88, %p89
      %p91 = scmp.ne.s32.totalorder %s77, %s78
      %p92 = scmp.eq.s32.totalorder %s28, 3
      %p93 = por %p91, %p92
      %p95 = scmp.ne.s32.totalorder %s78, %s94
      %p96 = scmp.eq.s32.totalorder %s28, 0
      %p97 = por %p95, %p96
      %s99 = sadd.s32 %s98, 1
      %p102 = scmp.eq.s32.totalorder %s22, 3
      %p103 = scmp.ne.s32.totalorder %s98, %s100
      %p104 = scmp.eq.s32.totalorder %s22, 0
      %p105 = por %p103, %p104
      %p106 = scmp.ne.s32.totalorder %s98, %s100
      %p107 = scmp.eq.s32.totalorder %s27, 3
      %p108 = por %p106, %p107
      %p109 = scmp.ne.s32.totalorder %s100, %s101
      %p110 = scmp.eq.s32.totalorder %s27, 0
      %p111 = por %p109, %p110
      %p112 = scmp.ne.s32.totalorder %s100, %s101
      %p113 = scmp.eq.s32.totalorder %s28, 3
      %p114 = por %p112, %p113
      %p116 = scmp.ne.s32.totalorder %s101, %s115
      %p117 = scmp.eq.s32.totalorder %s28, 0
      %p118 = por %p116, %p117
      %s120 = sadd.s32 %s119, 1
      %p123 = scmp.eq.s32.totalorder %s22, 3
      %p124 = scmp.ne.s32.totalorder %s119, %s121
      %p125 = scmp.eq.s32.totalorder %s22, 0
      %p126 = por %p124, %p125
      %p127 = scmp.ne.s32.totalorder %s119, %s121
      %p128 = scmp.eq.s32.totalorder %s27, 3
      %p129 = por %p127, %p128
      %p130 = scmp.ne.s32.totalorder %s121, %s122
      %p131 = scmp.eq.s32.totalorder %s27, 0
      %p132 = por %p130, %p131
      %p133 = scmp.ne.s32.totalorder %s121, %s122
      %p134 = scmp.eq.s32.totalorder %s28, 3
      %p135 = por %p133, %p134
      %p137 = scmp.ne.s32.totalorder %s122, %s136
      %p138 = scmp.eq.s32.totalorder %s28, 0
      %p139 = por %p137, %p138
      %s141 = sadd.s32 %s140, 1
      %p144 = scmp.eq.s32.totalorder %s22, 3
      %p145 = scmp.ne.s32.totalorder %s140, %s142
      %p146 = scmp.eq.s32.totalorder %s22, 0
      %p147 = por %p145, %p146
      %p148 = scmp.ne.s32.totalorder %s140, %s142
      %p149 = scmp.eq.s32.totalorder %s27, 3
      %p150 = por %p148, %p149
      %p151 = scmp.ne.s32.totalorder %s142, %s143
      %p152 = scmp.eq.s32.totalorder %s27, 0
      %p153 = por %p151, %p152
      %p154 = scmp.ne.s32.totalorder %s142, %s143
      %p155 = scmp.eq.s32.totalorder %s28, 3
      %p156 = por %p154, %p155
      %p158 = scmp.ne.s32.totalorder %s143, %s157
      %p159 = scmp.eq.s32.totalorder %s28, 0
      %p160 = por %p158, %p159
      %s162 = sadd.s32 %s161, 1
      %p165 = scmp.eq.s32.totalorder %s22, 3
      %p166 = scmp.ne.s32.totalorder %s161, %s163
      %p167 = scmp.eq.s32.totalorder %s22, 0
      %p168 = por %p166, %p167
      %p169 = scmp.ne.s32.totalorder %s161, %s163
      %p170 = scmp.eq.s32.totalorder %s27, 3
      %p171 = por %p169, %p170
      %p172 = scmp.ne.s32.totalorder %s163, %s164
      %p173 = scmp.eq.s32.totalorder %s27, 0
      %p174 = por %p172, %p173
      %p175 = scmp.ne.s32.totalorder %s163, %s164
      %p176 = scmp.eq.s32.totalorder %s28, 3
      %p177 = por %p175, %p176
      %p179 = scmp.ne.s32.totalorder %s164, %s178
      %p180 = scmp.eq.s32.totalorder %s28, 0
      %p181 = por %p179, %p180
      %s182 = ssub.s32 %s29, %s41
      %s183 = ssub.s32 %s30, %s37
      %s184 = sor.u32 %s182, %s183
      %p185 = scmp.eq.s32.totalorder %s184, 0
      %s187 = sadd.s32 %s186, 1
      %s188 = scalar_select %p185, %s186, %s187
      %p191 = pneg %p185
      %p192 = scmp.eq.s32.totalorder %s22, 3
      %p193 = por %p191, %p192
      %p194 = scmp.ne.s32.totalorder %s186, %s189
      %p195 = scmp.eq.s32.totalorder %s22, 0
      %p196 = por %p194, %p195
      %p197 = scmp.ne.s32.totalorder %s186, %s189
      %p198 = scmp.eq.s32.totalorder %s27, 3
      %p199 = por %p197, %p198
      %p200 = scmp.ne.s32.totalorder %s189, %s190
      %p201 = scmp.eq.s32.totalorder %s27, 0
      %p202 = por %p200, %p201
      %p203 = scmp.ne.s32.totalorder %s189, %s190
      %p204 = scmp.eq.s32.totalorder %s28, 3
      %p205 = por %p203, %p204
      %p207 = scmp.ne.s32.totalorder %s190, %s206
      %p208 = scmp.eq.s32.totalorder %s28, 0
      %p209 = por %p207, %p208
      %p210 = scmp.le.s32.totalorder 1, %s22
      %p211 = scmp.lt.s32.totalorder %s22, 5
      %p212 = pnand %p210, %p211
      %p213 = pneg %p212
      // Predicated region
      $region9: #{tpu_custom_call.1} parent=5 // pred_check
        _
      $region10: #{tpu_custom_call.1} parent=5 // pred_check_branch
        %215 = sbr.rel (%p212) target = $region12
      $region11: #{tpu_custom_call.1} parent=5 // pred_region
        %s216 = ssub.s32 %s22, 1
        // Predicated region
        $region13: #{tpu_custom_call.1} parent=11 // pred_check
          %p217 = pneg %p111
        $region14: #{tpu_custom_call.1} parent=11 // pred_check_branch
          %219 = sbr.rel (%p217) target = $region16
        $region15: #{tpu_custom_call.1} parent=11 // pred_region
          _
        $region16: #{tpu_custom_call.1} parent=11 // pred_fallthru
          _
        // Predicated region
        $region17: #{tpu_custom_call.1} parent=11 // pred_check
          %p220 = pneg %p132
        $region18: #{tpu_custom_call.1} parent=11 // pred_check_branch
          %222 = sbr.rel (%p220) target = $region20
        $region19: #{tpu_custom_call.1} parent=11 // pred_region
          _
        $region20: #{tpu_custom_call.1} parent=11 // pred_fallthru
          _
        // Predicated region
        $region21: #{tpu_custom_call.1} parent=11 // pred_check
          %p223 = pneg %p153
        $region22: #{tpu_custom_call.1} parent=11 // pred_check_branch
          %225 = sbr.rel (%p223) target = $region24
        $region23: #{tpu_custom_call.1} parent=11 // pred_region
          _
        $region24: #{tpu_custom_call.1} parent=11 // pred_fallthru
          _
        // Predicated region
        $region25: #{tpu_custom_call.1} parent=11 // pred_check
          %p226 = pneg %p174
        $region26: #{tpu_custom_call.1} parent=11 // pred_check_branch
          %228 = sbr.rel (%p226) target = $region28
        $region27: #{tpu_custom_call.1} parent=11 // pred_region
          _
        $region28: #{tpu_custom_call.1} parent=11 // pred_fallthru
          _
      $region12: #{tpu_custom_call.1} parent=5 // pred_fallthru
        _
      %p229 = scmp.lt.s32.totalorder %s22, 4
      // Predicated region
      $region29: #{tpu_custom_call.1} parent=5 // pred_check
        %p230 = pneg %p229
      $region30: #{tpu_custom_call.1} parent=5 // pred_check_branch
        %232 = sbr.rel (%p230) target = $region32
      $region31: #{tpu_custom_call.1} parent=5 // pred_region
        // Predicated region
        $region33: #{tpu_custom_call.1} parent=31 // pred_check
          %p233 = pneg %p56
        $region34: #{tpu_custom_call.1} parent=31 // pred_check_branch
          %235 = sbr.rel (%p233) target = $region36
        $region35: #{tpu_custom_call.1} parent=31 // pred_region
          %s236 = sand.u32 %s46, 1
          %s237 = scalar_lea.sflag [#allocation4], %s236
          %s238 = sand.u32 %s46, 1
          %s239 = smul.addr %s238, 4
          %s240 = scalar_lea.vmem [#allocation3], %s239
          %s242 = ssub.s32 64, 64
          %243 = vsyncadd %s237, %s242
          %s244 = smul.addr %s29, 2
          %s245 = sadd.s32 %s30, %s244
          %s246 = smul.addr %s245, 64
          %s247 = scalar_lea.hbm %s0, %s246
          %s249 = sshll.u32 %s240, 4
          %s250 = int_to_ptr.vmem [resolvable:$true] %s249
          %252 = dma.hbm_to_vmem [thread:$0]  %s247, 64, %s250, %s237
        $region36: #{tpu_custom_call.1} parent=31 // pred_fallthru
          _
        // Predicated region
        $region37: #{tpu_custom_call.1} parent=31 // pred_check
          %p253 = pneg %p84
        $region38: #{tpu_custom_call.1} parent=31 // pred_check_branch
          %255 = sbr.rel (%p253) target = $region40
        $region39: #{tpu_custom_call.1} parent=31 // pred_region
          %s256 = sand.u32 %s74, 1
          %s257 = scalar_lea.sflag [#allocation7], %s256
          %s258 = sand.u32 %s74, 1
          %s259 = smul.addr %s258, 4
          %s260 = scalar_lea.vmem [#allocation6], %s259
          %s262 = ssub.s32 64, 64
          %263 = vsyncadd %s257, %s262
          %s264 = smul.addr %s29, 2
          %s265 = sadd.s32 %s30, %s264
          %s266 = smul.addr %s265, 64
          %s267 = scalar_lea.hbm %s1, %s266
          %s269 = sshll.u32 %s260, 4
          %s270 = int_to_ptr.vmem [resolvable:$true] %s269
          %272 = dma.hbm_to_vmem [thread:$0]  %s267, 64, %s270, %s257
        $region40: #{tpu_custom_call.1} parent=31 // pred_fallthru
          _
      $region32: #{tpu_custom_call.1} parent=5 // pred_fallthru
        _
      %p273 = scmp.le.s32.totalorder 1, %s22
      %p274 = scmp.lt.s32.totalorder %s22, 5
      %p275 = pnand %p273, %p274
      %p276 = pneg %p275
      // Predicated region
      $region41: #{tpu_custom_call.1} parent=5 // pred_check
        _
      $region42: #{tpu_custom_call.1} parent=5 // pred_check_branch
        %278 = sbr.rel (%p275) target = $region44
      $region43: #{tpu_custom_call.1} parent=5 // pred_region
        %s279 = ssub.s32 %s22, 1
        %s280 = sand.u32 %s49, 1
        %s281 = scalar_lea.sflag [#allocation4], %s280
        %s282 = sand.u32 %s49, 1
        %s283 = smul.addr %s282, 4
        %s284 = scalar_lea.vmem [#allocation3], %s283
        // Predicated region
        $region45: #{tpu_custom_call.1} parent=43 // pred_check
          %p285 = pneg %p62
        $region46: #{tpu_custom_call.1} parent=43 // pred_check_branch
          %287 = sbr.rel (%p285) target = $region48
        $region47: #{tpu_custom_call.1} parent=43 // pred_region
          %288 = dma.done %s281, 64
        $region48: #{tpu_custom_call.1} parent=43 // pred_fallthru
          _
        %s289 = sand.u32 %s77, 1
        %s290 = scalar_lea.sflag [#allocation7], %s289
        %s291 = sand.u32 %s77, 1
        %s292 = smul.addr %s291, 4
        %s293 = scalar_lea.vmem [#allocation6], %s292
        // Predicated region
        $region49: #{tpu_custom_call.1} parent=43 // pred_check
          %p294 = pneg %p90
        $region50: #{tpu_custom_call.1} parent=43 // pred_check_branch
          %296 = sbr.rel (%p294) target = $region52
        $region51: #{tpu_custom_call.1} parent=43 // pred_region
          %297 = dma.done %s290, 64
        $region52: #{tpu_custom_call.1} parent=43 // pred_fallthru
          _
        %s298 = sand.u32 %s49, 1
        %s299 = scalar_lea.sflag [#allocation4], %s298
        %s300 = sand.u32 %s49, 1
        %s301 = smul.addr %s300, 4
        %s302 = scalar_lea.vmem [#allocation3], %s301
        %p303 = pneg %p62
        %p304 = pneg %p59
        %s305 = sand.u32 %s77, 1
        %s306 = scalar_lea.sflag [#allocation7], %s305
        %s307 = sand.u32 %s77, 1
        %s308 = smul.addr %s307, 4
        %s309 = scalar_lea.vmem [#allocation6], %s308
        %p310 = pneg %p90
        %p311 = pneg %p87
        %p312 = pneg %p111
        %p313 = pneg %p108
        %p314 = pneg %p132
        %p315 = pneg %p129
        %p316 = pneg %p153
        %p317 = pneg %p150
        %p318 = pneg %p174
        %p319 = pneg %p171
        %p320 = pneg %p202
        %p321 = pneg %p199
        %s322 = sand.u32 %s189, 1
        %s323 = scalar_lea.sflag [#allocation5], %s322
        %s324 = sand.u32 %s189, 1
        %s325 = smul.addr %s324, 4
        %s326 = scalar_lea.vmem [#allocation8], %s325
        %v327 = vld [vmem:[%s284] sm:$0xf]
        %v328 = vld [vmem:[%s293] sm:$0xf]
        %s329 = sld [smem:[#allocation2]]
        %v330 = vld [vmem:[%s2] sm:$0xf]
        %v331 = vld [vmem:[%s3] sm:$0xf]
        %vm332 = vcmask 31744
        %v334 = vsel %vm332, %v331, 0
        %vm336 = vcmask 1043456
        %v338 = vsel %vm336, %v328, 0
        %340 = vmatprep.subr.mxu0 0.0
        %341 = vmatpush1.msra.mxu0 %v338
        %342 = vmatprep.subr.mxu0 0.0
        %343 = vmatpush1.msra.mxu0 0.0
        %344 = vmatprep.subr.mxu0 0.0
        %345 = vmatpush1.msra.mxu0 0.0
        %346 = vmatprep.subr.mxu0 0.0
        %347 = vmatpush1.msra.mxu0 0.0
        %348 = vmatprep.subr.mxu0 0.0
        %349 = vmatpush1.msra.mxu0 0.0
        %350 = vmatprep.subr.mxu0 0.0
        %351 = vmatpush1.msra.mxu0 0.0
        %352 = vmatprep.subr.mxu0 0.0
        %353 = vmatpush1.msra.mxu0 0.0
        %354 = vmatprep.subr.mxu0 0.0
        %355 = vmatpush1.msra.mxu0 0.0
        %356 = vmatprep.subr.mxu0 0.0
        %357 = vmatpush1.msra.mxu0 0.0
        %358 = vmatprep.subr.mxu0 0.0
        %359 = vmatpush1.msra.mxu0 0.0
        %360 = vmatprep.subr.mxu0 0.0
        %361 = vmatpush1.msra.mxu0 0.0
        %362 = vmatprep.subr.mxu0 0.0
        %363 = vmatpush1.msra.mxu0 0.0
        %364 = vmatprep.subr.mxu0 0.0
        %365 = vmatpush1.msra.mxu0 0.0
        %366 = vmatprep.subr.mxu0 0.0
        %367 = vmatpush1.msra.mxu0 0.0
        %368 = vmatprep.subr.mxu0 0.0
        %369 = vmatpush1.msra.mxu0 0.0
        %370 = vmatprep.subr.mxu0 0.0
        %371 = vmatpush1.msra.mxu0 0.0
        %372 = vmatprep.subr.mxu0 0.0
        %373 = vmatpush1.msra.mxu0 0.0
        %374 = vmatprep.subr.mxu0 0.0
        %375 = vmatpush1.msra.mxu0 0.0
        %376 = vmatprep.subr.mxu0 0.0
        %377 = vmatpush1.msra.mxu0 0.0
        %378 = vmatprep.subr.mxu0 0.0
        %379 = vmatpush1.msra.mxu0 0.0
        %380 = vmatprep.subr.mxu0 0.0
        %381 = vmatpush1.msra.mxu0 0.0
        %382 = vmatprep.subr.mxu0 0.0
        %383 = vmatpush1.msra.mxu0 0.0
        %384 = vmatprep.subr.mxu0 0.0
        %385 = vmatpush1.msra.mxu0 0.0
        %386 = vmatprep.subr.mxu0 0.0
        %387 = vmatpush1.msra.mxu0 0.0
        %388 = vmatprep.subr.mxu0 0.0
        %389 = vmatpush1.msra.mxu0 0.0
        %390 = vmatprep.subr.mxu0 0.0
        %391 = vmatpush1.msra.mxu0 0.0
        %392 = vmatprep.subr.mxu0 0.0
        %393 = vmatpush1.msra.mxu0 0.0
        %394 = vmatprep.subr.mxu0 0.0
        %395 = vmatpush1.msra.mxu0 0.0
        %396 = vmatprep.subr.mxu0 0.0
        %397 = vmatpush1.msra.mxu0 0.0
        %398 = vmatprep.subr.mxu0 0.0
        %399 = vmatpush1.msra.mxu0 0.0
        %400 = vmatprep.subr.mxu0 0.0
        %401 = vmatpush1.msra.mxu0 0.0
        %402 = vmatprep.subr.mxu0 0.0
        %403 = vmatpush1.msra.mxu0 0.0
        %404 = vmatprep.mubr.f32.mxu0 0.0
        %405 = vmatmul.mubr.f32.gmra.mrb[0].mxu0 %v334
        %v406 = vpop.f32.mrb[0].mxu0
        %v407 = vadd.f32 0.0, %v406
        %v408 = vpop.f32.mrb[0].mxu0
        %409 = vdwg.mxu0
        %v411 = vsel %vm332, %v330, 0
        %v414 = vsel %vm336, %v327, 0
        %416 = vmatprep.subr.mxu0 0.0
        %417 = vmatpush1.msra.mxu0 %v414
        %418 = vmatprep.subr.mxu0 0.0
        %419 = vmatpush1.msra.mxu0 0.0
        %420 = vmatprep.subr.mxu0 0.0
        %421 = vmatpush1.msra.mxu0 0.0
        %422 = vmatprep.subr.mxu0 0.0
        %423 = vmatpush1.msra.mxu0 0.0
        %424 = vmatprep.subr.mxu0 0.0
        %425 = vmatpush1.msra.mxu0 0.0
        %426 = vmatprep.subr.mxu0 0.0
        %427 = vmatpush1.msra.mxu0 0.0
        %428 = vmatprep.subr.mxu0 0.0
        %429 = vmatpush1.msra.mxu0 0.0
        %430 = vmatprep.subr.mxu0 0.0
        %431 = vmatpush1.msra.mxu0 0.0
        %432 = vmatprep.subr.mxu0 0.0
        %433 = vmatpush1.msra.mxu0 0.0
        %434 = vmatprep.subr.mxu0 0.0
        %435 = vmatpush1.msra.mxu0 0.0
        %436 = vmatprep.subr.mxu0 0.0
        %437 = vmatpush1.msra.mxu0 0.0
        %438 = vmatprep.subr.mxu0 0.0
        %439 = vmatpush1.msra.mxu0 0.0
        %440 = vmatprep.subr.mxu0 0.0
        %441 = vmatpush1.msra.mxu0 0.0
        %442 = vmatprep.subr.mxu0 0.0
        %443 = vmatpush1.msra.mxu0 0.0
        %444 = vmatprep.subr.mxu0 0.0
        %445 = vmatpush1.msra.mxu0 0.0
        %446 = vmatprep.subr.mxu0 0.0
        %447 = vmatpush1.msra.mxu0 0.0
        %448 = vmatprep.subr.mxu0 0.0
        %449 = vmatpush1.msra.mxu0 0.0
        %450 = vmatprep.subr.mxu0 0.0
        %451 = vmatpush1.msra.mxu0 0.0
        %452 = vmatprep.subr.mxu0 0.0
        %453 = vmatpush1.msra.mxu0 0.0
        %454 = vmatprep.subr.mxu0 0.0
        %455 = vmatpush1.msra.mxu0 0.0
        %456 = vmatprep.subr.mxu0 0.0
        %457 = vmatpush1.msra.mxu0 0.0
        %458 = vmatprep.subr.mxu0 0.0
        %459 = vmatpush1.msra.mxu0 0.0
        %460 = vmatprep.subr.mxu0 0.0
        %461 = vmatpush1.msra.mxu0 0.0
        %462 = vmatprep.subr.mxu0 0.0
        %463 = vmatpush1.msra.mxu0 0.0
        %464 = vmatprep.subr.mxu0 0.0
        %465 = vmatpush1.msra.mxu0 0.0
        %466 = vmatprep.subr.mxu0 0.0
        %467 = vmatpush1.msra.mxu0 0.0
        %468 = vmatprep.subr.mxu0 0.0
        %469 = vmatpush1.msra.mxu0 0.0
        %470 = vmatprep.subr.mxu0 0.0
        %471 = vmatpush1.msra.mxu0 0.0
        %472 = vmatprep.subr.mxu0 0.0
        %473 = vmatpush1.msra.mxu0 0.0
        %474 = vmatprep.subr.mxu0 0.0
        %475 = vmatpush1.msra.mxu0 0.0
        %476 = vmatprep.subr.mxu0 0.0
        %477 = vmatpush1.msra.mxu0 0.0
        %478 = vmatprep.subr.mxu0 0.0
        %479 = vmatpush1.msra.mxu0 0.0
        %480 = vmatprep.mubr.f32.mxu0 0.0
        %481 = vmatmul.mubr.f32.gmra.mrb[0].mxu0 %v411
        %v482 = vpop.f32.mrb[0].mxu0
        %v483 = vadd.f32 %v407, %v482
        %v484 = vpop.f32.mrb[0].mxu0
        %485 = vdwg.mxu0
        %v486 = vld [vmem:[%s4] sm:$0xf]
        %488 = vset.pattern.permute.xlu0 0
        %489 = vperm.xlu0 %488, %v486
        %v490 = vpop.permute.xlu0 %489
        %v492 = vadd.f32 %v483, %v490
        %v493 = vstv %s329
        %v494 = vmul.f32 %v493, %v492
        %v495 = vadd.f32 %v494, %v327
        %496 = vst [vmem:[%s326] sm:$0xf] %v495
        %s497 = sand.u32 %s189, 1
        %s498 = scalar_lea.sflag [#allocation5], %s497
        %s499 = sand.u32 %s189, 1
        %s500 = smul.addr %s499, 4
        %s501 = scalar_lea.vmem [#allocation8], %s500
        // Predicated region
        $region53: #{tpu_custom_call.1} parent=43 // pred_check
          %p502 = pneg %p199
        $region54: #{tpu_custom_call.1} parent=43 // pred_check_branch
          %504 = sbr.rel (%p502) target = $region56
        $region55: #{tpu_custom_call.1} parent=43 // pred_region
          %s506 = ssub.s32 64, 64
          %507 = vsyncadd %s498, %s506
          %s508 = smul.addr %s31, 2
          %s509 = sadd.s32 %s32, %s508
          %s510 = smul.addr %s509, 64
          %s511 = scalar_lea.hbm %s6, %s510
          %s513 = sshll.u32 %s501, 4
          %s514 = int_to_ptr.vmem [resolvable:$true] %s513
          %516 = dma.vmem_to_hbm [thread:$0]  %s514, 64, %s511, %s498
        $region56: #{tpu_custom_call.1} parent=43 // pred_fallthru
          _
      $region44: #{tpu_custom_call.1} parent=5 // pred_fallthru
        _
      %p517 = scmp.le.s32.totalorder 2, %s22
      // Predicated region
      $region57: #{tpu_custom_call.1} parent=5 // pred_check
        %p518 = pneg %p517
      $region58: #{tpu_custom_call.1} parent=5 // pred_check_branch
        %520 = sbr.rel (%p518) target = $region60
      $region59: #{tpu_custom_call.1} parent=5 // pred_region
        %s521 = ssub.s32 %s22, 2
        // Predicated region
        $region61: #{tpu_custom_call.1} parent=59 // pred_check
          %p522 = pneg %p205
        $region62: #{tpu_custom_call.1} parent=59 // pred_check_branch
          %524 = sbr.rel (%p522) target = $region64
        $region63: #{tpu_custom_call.1} parent=59 // pred_region
          %s525 = sand.u32 %s190, 1
          %s526 = scalar_lea.sflag [#allocation5], %s525
          %s527 = sand.u32 %s190, 1
          %s528 = smul.addr %s527, 4
          %s529 = scalar_lea.vmem [#allocation8], %s528
          %530 = dma.done %s526, 64
        $region64: #{tpu_custom_call.1} parent=59 // pred_fallthru
          _
      $region60: #{tpu_custom_call.1} parent=5 // pred_fallthru
        _
    $region6: #{tpu_custom_call.1} parent=1 // loop_footer
      %s26 = sadd.s32 1, %s22
    $region7: #{tpu_custom_call.1} parent=1 // loop_footer_branch
      %21 = sbr.rel target = $region3
    $region8: #{tpu_custom_call.1} parent=1 // loop_exit
      _
    %531 = vsyncpa [#allocation4], 1
    %s532 = scalar_lea.sflag [#allocation4], 1
    %533 = vsyncpa %s532, 1
    %534 = vsyncpa [#allocation7], 1
    %s535 = scalar_lea.sflag [#allocation7], 1
    %536 = vsyncpa %s535, 1
    %537 = vsyncpa [#allocation5], 1
    %s538 = scalar_lea.sflag [#allocation5], 1
    %539 = vsyncpa %s538, 1

</llo_original>
